<compile_context>
chip_gen: v7x
topology: tpu7x:2x2x1
jax: 0.10.0
libtpu: 0.0.40
codegen_flags: <defaults>
</compile_context>

<pallas_src>
import jax
import jax.numpy as jnp
from jax import lax
from jax.experimental import pallas as pl
from jax.experimental.pallas import tpu as pltpu


def critic_kernel(x_ref, a_ref,
                  w1x_ref, w1a_ref, b1_ref,
                  w2_ref, b2_ref,
                  w3_ref, b3_ref,
                  o_ref):
    # Contract last axes: W[out, in] . X[BT, in]^T -> [out, BT] (feature-major,
    # lane axis = batch).  The transposed-rhs handling rides the MXU/XLU path.
    dn = (((1,), (1,)), ((), ()))
    xb = x_ref[...].astype(jnp.bfloat16)          # [BT, n_states]
    ab = a_ref[...].astype(jnp.bfloat16)          # [BT, n_actions]

    # Layer 1: relu(W1 @ [x; a]^T + b1); torch.cat realized as exact split matmul.
    h1 = (lax.dot_general(w1x_ref[...], xb, dn, preferred_element_type=jnp.float32)
          + lax.dot_general(w1a_ref[...], ab, dn, preferred_element_type=jnp.float32)
          + b1_ref[...])                          # [32, BT] f32
    h1 = jnp.maximum(h1, 0.0).astype(jnp.bfloat16)

    # Layer 2: relu(W2 @ h1 + b2)
    h2 = (jnp.dot(w2_ref[...], h1, preferred_element_type=jnp.float32)
          + b2_ref[...])                          # [64, BT] f32
    h2 = jnp.maximum(h2, 0.0).astype(jnp.bfloat16)

    # Output layer: w3 @ h2 + b3 (no activation) -> lane-dense [1, BT] store.
    o_ref[...] = (jnp.dot(w3_ref[...], h2, preferred_element_type=jnp.float32)
                  + b3_ref[...])                  # [1, BT] f32


def _round_up(v, m):
    return ((v + m - 1) // m) * m


def critic_forward(x, a, params, block_b=4096):
    """x: [B, n_states], a: [B, n_actions] -> q: [B] (float32)."""
    B, n_states = x.shape
    n_actions = a.shape[1]
    w1, b1, w2, b2, w3, b3 = params               # torch [out, in] layout

    # ---- parameter prep (tiny, ~10 KB): split W1 (== the concat), bf16 matmul
    # operands, f32 column biases for lane broadcast.
    w1x = w1[:, :n_states].astype(jnp.bfloat16)   # [32, n_states]
    w1a = w1[:, n_states:].astype(jnp.bfloat16)   # [32, n_actions]
    w2b = w2.astype(jnp.bfloat16)                 # [64, 32]
    w3b = w3.astype(jnp.bfloat16)                 # [1, 64]
    b1c = b1.astype(jnp.float32).reshape(-1, 1)   # [32, 1]
    b2c = b2.astype(jnp.float32).reshape(-1, 1)   # [64, 1]
    b3c = b3.astype(jnp.float32).reshape(-1, 1)   # [1, 1]

    # ---- batch tile: multiple of 128 (lane-aligned), capped by block_b, and
    # targeting >= 2 tiles when the batch allows it (v7x megacore).
    block_b = max(128, min(16384, _round_up(int(block_b), 128)))
    BT = min(block_b,
             max(128, _round_up(pl.cdiv(B, 2), 128)),   # aim for >= 2 tiles
             _round_up(B, 128))                          # never bigger than needed
    n_tiles = pl.cdiv(B, BT)
    Bp = n_tiles * BT                                    # padded output width

    def batch_spec(cols):
        # batch-major activation tile; ragged last block read is masked by Pallas
        return pl.BlockSpec((BT, cols), lambda i: (i, 0))

    def const_spec(arr):
        # full-shape block + constant block index: DMA'd once, VMEM-resident
        return pl.BlockSpec(arr.shape, lambda i: (0, 0))

    out = pl.pallas_call(
        critic_kernel,
        out_shape=jax.ShapeDtypeStruct((1, Bp), jnp.float32),
        grid=(n_tiles,),
        in_specs=[
            batch_spec(n_states),                 # x tile  [BT, n_states]
            batch_spec(n_actions),                # a tile  [BT, n_actions]
            const_spec(w1x), const_spec(w1a), const_spec(b1c),
            const_spec(w2b), const_spec(b2c),
            const_spec(w3b), const_spec(b3c),
        ],
        out_specs=pl.BlockSpec((1, BT), lambda i: (0, i)),
        compiler_params=pltpu.CompilerParams(
            dimension_semantics=("parallel",),    # shard batch tiles across v7x TCs
            vmem_limit_bytes=32 * 1024 * 1024,    # ~12 MiB worst case at BT=16384
        ),
    )(x, a, w1x, w1a, b1c, w2b, b2c, w3b, b3c)

    # [1, Bp] -> [B]  (drop tile padding; torch.squeeze(out, -1))
    return out[0, :B]


def init_params(key, n_states, n_actions):
    """Deterministic init mimicking nn.Linear's uniform(-1/sqrt(fan_in), ...)."""
    def linear(key, fan_in, fan_out):
        kw, kb = jax.random.split(key)
        bound = 1.0 / jnp.sqrt(float(fan_in))
        w = jax.random.uniform(kw, (fan_out, fan_in), jnp.float32, -bound, bound)
        b = jax.random.uniform(kb, (fan_out,), jnp.float32, -bound, bound)
        return w, b

    k1, k2, k3 = jax.random.split(key, 3)
    w1, b1 = linear(k1, n_states + n_actions, 32)
    w2, b2 = linear(k2, 32, 64)
    w3, b3 = linear(k3, 64, 1)
    return (w1, b1, w2, b2, w3, b3)


def _reference(x, a, params):
    """Pure-JAX reference using the same bf16-operand / f32-accumulate math."""
    w1, b1, w2, b2, w3, b3 = params
    bf = jnp.bfloat16
    xa = jnp.concatenate([x, a], axis=-1).astype(bf)
    h1 = jnp.maximum(jnp.dot(xa, w1.T.astype(bf),
                             preferred_element_type=jnp.float32) + b1, 0.0)
    h2 = jnp.maximum(jnp.dot(h1.astype(bf), w2.T.astype(bf),
                             preferred_element_type=jnp.float32) + b2, 0.0)
    q = jnp.dot(h2.astype(bf), w3.T.astype(bf),
                preferred_element_type=jnp.float32) + b3
    return jnp.squeeze(q, axis=-1)


if __name__ == "__main__":
    n_states, n_actions = 8, 4
    key = jax.random.PRNGKey(0)
    kx, ka, kp = jax.random.split(key, 3)
    params = init_params(kp, n_states, n_actions)

    # Small demo batch: single 128-wide tile, ragged (masked) input read.
    B = 2
    x = jax.random.normal(kx, (B, n_states), dtype=jnp.float32)
    a = jax.random.normal(ka, (B, n_actions), dtype=jnp.float32)
    q = critic_forward(x, a, params)
    jax.block_until_ready(q)
    q_ref = _reference(x, a, params)
    assert q.shape == (B,)
    assert jnp.allclose(q, q_ref, atol=1e-3, rtol=1e-3), (q, q_ref)

    # Multi-tile path: 2 parallel tiles (BT=256), ragged last input block.
    B2 = 384
    x2 = jax.random.normal(kx, (B2, n_states), dtype=jnp.float32)
    a2 = jax.random.normal(ka, (B2, n_actions), dtype=jnp.float32)
    q2 = critic_forward(x2, a2, params)
    jax.block_until_ready(q2)
    q2_ref = _reference(x2, a2, params)
    assert q2.shape == (B2,)
    assert jnp.allclose(q2, q2_ref, atol=1e-3, rtol=1e-3)

    print("KERNEL_OK")
</pallas_src>

<mosaic_0001>
module attributes {stable_mosaic.version = 11 : i64} {
  func.func @critic_kernel(%arg0: i32, %arg1: memref<128x8xf32, #tpu.memory_space<vmem>>, %arg2: memref<128x4xf32, #tpu.memory_space<vmem>>, %arg3: memref<32x8xbf16, #tpu.memory_space<vmem>>, %arg4: memref<32x4xbf16, #tpu.memory_space<vmem>>, %arg5: memref<32x1xf32, #tpu.memory_space<vmem>>, %arg6: memref<64x32xbf16, #tpu.memory_space<vmem>>, %arg7: memref<64x1xf32, #tpu.memory_space<vmem>>, %arg8: memref<1x64xbf16, #tpu.memory_space<vmem>>, %arg9: memref<1x1xf32, #tpu.memory_space<vmem>>, %arg10: memref<1x128xf32, #tpu.memory_space<vmem>>) attributes {dimension_semantics = [#tpu.dimension_semantics<parallel>], iteration_bounds = array<i64: 1>, scalar_prefetch = 0 : i64, scratch_operands = 0 : i64, tpu.core_type = #tpu.core_type<tc>, window_params = [{transform_indices = @transform_0, window_bounds = array<i64: 128, 8>}, {transform_indices = @transform_1, window_bounds = array<i64: 128, 4>}, {pipeline_mode = #tpu.pipeline_mode<synchronous>, transform_indices = @transform_2, window_bounds = array<i64: 32, 8>}, {pipeline_mode = #tpu.pipeline_mode<synchronous>, transform_indices = @transform_3, window_bounds = array<i64: 32, 4>}, {pipeline_mode = #tpu.pipeline_mode<synchronous>, transform_indices = @transform_4, window_bounds = array<i64: 32, 1>}, {pipeline_mode = #tpu.pipeline_mode<synchronous>, transform_indices = @transform_5, window_bounds = array<i64: 64, 32>}, {pipeline_mode = #tpu.pipeline_mode<synchronous>, transform_indices = @transform_6, window_bounds = array<i64: 64, 1>}, {pipeline_mode = #tpu.pipeline_mode<synchronous>, transform_indices = @transform_7, window_bounds = array<i64: 1, 64>}, {pipeline_mode = #tpu.pipeline_mode<synchronous>, transform_indices = @transform_8, window_bounds = array<i64: 1, 1>}, {transform_indices = @transform_9, window_bounds = array<i64: 1, 128>}]} {
    %c0 = arith.constant 0 : index
    %c0_0 = arith.constant 0 : index
    %0 = vector.load %arg1[%c0, %c0_0] : memref<128x8xf32, #tpu.memory_space<vmem>>, vector<128x8xf32>
    %1 = arith.truncf %0 : vector<128x8xf32> to vector<128x8xbf16>
    %c0_1 = arith.constant 0 : index
    %c0_2 = arith.constant 0 : index
    %2 = vector.load %arg2[%c0_1, %c0_2] : memref<128x4xf32, #tpu.memory_space<vmem>>, vector<128x4xf32>
    %3 = arith.truncf %2 : vector<128x4xf32> to vector<128x4xbf16>
    %c0_3 = arith.constant 0 : index
    %c0_4 = arith.constant 0 : index
    %4 = vector.load %arg3[%c0_3, %c0_4] : memref<32x8xbf16, #tpu.memory_space<vmem>>, vector<32x8xbf16>
    %cst = arith.constant dense<0.000000e+00> : vector<32x128xf32>
    %5 = tpu.matmul %4, %1, %cst {dimension_numbers = #tpu.dot_dimension_numbers<[1], [1], [0], [0], [0, 0, 1, 0], [], []>} : vector<32x8xbf16>, vector<128x8xbf16>, vector<32x128xf32> -> vector<32x128xf32>
    %c0_5 = arith.constant 0 : index
    %c0_6 = arith.constant 0 : index
    %6 = vector.load %arg4[%c0_5, %c0_6] : memref<32x4xbf16, #tpu.memory_space<vmem>>, vector<32x4xbf16>
    %cst_7 = arith.constant dense<0.000000e+00> : vector<32x128xf32>
    %7 = tpu.matmul %6, %3, %cst_7 {dimension_numbers = #tpu.dot_dimension_numbers<[1], [1], [0], [0], [0, 0, 1, 0], [], []>} : vector<32x4xbf16>, vector<128x4xbf16>, vector<32x128xf32> -> vector<32x128xf32>
    %8 = arith.addf %5, %7 : vector<32x128xf32>
    %c0_8 = arith.constant 0 : index
    %c0_9 = arith.constant 0 : index
    %9 = vector.load %arg5[%c0_8, %c0_9] : memref<32x1xf32, #tpu.memory_space<vmem>>, vector<32x1xf32>
    %10 = vector.broadcast %9 : vector<32x1xf32> to vector<32x128xf32>
    %11 = arith.addf %8, %10 : vector<32x128xf32>
    %cst_10 = arith.constant 0.000000e+00 : f32
    %12 = vector.broadcast %cst_10 : f32 to vector<32x128xf32>
    %13 = arith.maximumf %11, %12 : vector<32x128xf32>
    %14 = arith.truncf %13 : vector<32x128xf32> to vector<32x128xbf16>
    %c0_11 = arith.constant 0 : index
    %c0_12 = arith.constant 0 : index
    %15 = vector.load %arg6[%c0_11, %c0_12] : memref<64x32xbf16, #tpu.memory_space<vmem>>, vector<64x32xbf16>
    %cst_13 = arith.constant dense<0.000000e+00> : vector<64x128xf32>
    %16 = tpu.matmul %15, %14, %cst_13 {dimension_numbers = #tpu.dot_dimension_numbers<[1], [0], [0], [1], [0, 0, 1, 1], [], []>} : vector<64x32xbf16>, vector<32x128xbf16>, vector<64x128xf32> -> vector<64x128xf32>
    %c0_14 = arith.constant 0 : index
    %c0_15 = arith.constant 0 : index
    %17 = vector.load %arg7[%c0_14, %c0_15] : memref<64x1xf32, #tpu.memory_space<vmem>>, vector<64x1xf32>
    %18 = vector.broadcast %17 : vector<64x1xf32> to vector<64x128xf32>
    %19 = arith.addf %16, %18 : vector<64x128xf32>
    %cst_16 = arith.constant 0.000000e+00 : f32
    %20 = vector.broadcast %cst_16 : f32 to vector<64x128xf32>
    %21 = arith.maximumf %19, %20 : vector<64x128xf32>
    %22 = arith.truncf %21 : vector<64x128xf32> to vector<64x128xbf16>
    %c0_17 = arith.constant 0 : index
    %c0_18 = arith.constant 0 : index
    %23 = vector.load %arg8[%c0_17, %c0_18] : memref<1x64xbf16, #tpu.memory_space<vmem>>, vector<1x64xbf16>
    %cst_19 = arith.constant dense<0.000000e+00> : vector<1x128xf32>
    %24 = tpu.matmul %23, %22, %cst_19 {dimension_numbers = #tpu.dot_dimension_numbers<[1], [0], [0], [1], [0, 0, 1, 1], [], []>} : vector<1x64xbf16>, vector<64x128xbf16>, vector<1x128xf32> -> vector<1x128xf32>
    %c0_20 = arith.constant 0 : index
    %c0_21 = arith.constant 0 : index
    %25 = vector.load %arg9[%c0_20, %c0_21] : memref<1x1xf32, #tpu.memory_space<vmem>>, vector<1x1xf32>
    %26 = vector.broadcast %25 : vector<1x1xf32> to vector<1x128xf32>
    %27 = arith.addf %24, %26 : vector<1x128xf32>
    %c0_22 = arith.constant 0 : index
    %c0_23 = arith.constant 0 : index
    %28 = vector.load %arg10[%c0_22, %c0_23] : memref<1x128xf32, #tpu.memory_space<vmem>>, vector<1x128xf32>
    tpu.vector_store %arg10[%c0_22, %c0_23], %27 {strides = array<i32>} : memref<1x128xf32, #tpu.memory_space<vmem>>, vector<1x128xf32>,
    return
  }
  func.func @transform_0(%arg0: i32) -> (i32, i32) {
    %c0_i32 = arith.constant 0 : i32
    %c0_i32_0 = arith.constant 0 : i32
    return %arg0, %c0_i32 : i32, i32
  }
  func.func @transform_1(%arg0: i32) -> (i32, i32) {
    %c0_i32 = arith.constant 0 : i32
    %c0_i32_0 = arith.constant 0 : i32
    return %arg0, %c0_i32 : i32, i32
  }
  func.func @transform_2(%arg0: i32) -> (i32, i32) {
    %c0_i32 = arith.constant 0 : i32
    %c0_i32_0 = arith.constant 0 : i32
    %c0_i32_1 = arith.constant 0 : i32
    return %c0_i32, %c0_i32_0 : i32, i32
  }
  func.func @transform_3(%arg0: i32) -> (i32, i32) {
    %c0_i32 = arith.constant 0 : i32
    %c0_i32_0 = arith.constant 0 : i32
    %c0_i32_1 = arith.constant 0 : i32
    return %c0_i32, %c0_i32_0 : i32, i32
  }
  func.func @transform_4(%arg0: i32) -> (i32, i32) {
    %c0_i32 = arith.constant 0 : i32
    %c0_i32_0 = arith.constant 0 : i32
    %c0_i32_1 = arith.constant 0 : i32
    return %c0_i32, %c0_i32_0 : i32, i32
  }
  func.func @transform_5(%arg0: i32) -> (i32, i32) {
    %c0_i32 = arith.constant 0 : i32
    %c0_i32_0 = arith.constant 0 : i32
    %c0_i32_1 = arith.constant 0 : i32
    return %c0_i32, %c0_i32_0 : i32, i32
  }
  func.func @transform_6(%arg0: i32) -> (i32, i32) {
    %c0_i32 = arith.constant 0 : i32
    %c0_i32_0 = arith.constant 0 : i32
    %c0_i32_1 = arith.constant 0 : i32
    return %c0_i32, %c0_i32_0 : i32, i32
  }
  func.func @transform_7(%arg0: i32) -> (i32, i32) {
    %c0_i32 = arith.constant 0 : i32
    %c0_i32_0 = arith.constant 0 : i32
    %c0_i32_1 = arith.constant 0 : i32
    return %c0_i32, %c0_i32_0 : i32, i32
  }
  func.func @transform_8(%arg0: i32) -> (i32, i32) {
    %c0_i32 = arith.constant 0 : i32
    %c0_i32_0 = arith.constant 0 : i32
    %c0_i32_1 = arith.constant 0 : i32
    return %c0_i32, %c0_i32_0 : i32, i32
  }
  func.func @transform_9(%arg0: i32) -> (i32, i32) {
    %c0_i32 = arith.constant 0 : i32
    %c0_i32_0 = arith.constant 0 : i32
    return %c0_i32, %arg0 : i32, i32
  }
}

</mosaic_0001>

<llo_original>
// kernel: tpu_custom_call.1
$region0: #{tpu_custom_call.1}
  #allocation0 [shape = 'u32[]', space=smem, size = 0x4, offset = 0x4, fixed_abs, tag = 'smem constant byte address 0x4 - core index']
  #allocation1 [shape = 'u32[144,128]{1,0:T(1,128)}', space=vmem, size = 0x12000, scoped, tag = 'internal scratch']
  #allocation2 [shape = 'f32[1,1]{1,0:T(1,128)S(1)}', space=vmem, size = 0x200, scoped, tag = 'scoped memory for tpu_custom_call.1']
  %s0 = inlined_call_operand.vmem [shape: f32[2,8], index: 0, kind: input, shape index: {}]
  %s1 = inlined_call_operand.vmem [shape: f32[2,4], index: 1, kind: input, shape index: {}]
  %s2 = inlined_call_operand.vmem [shape: bf16[32,8], index: 2, kind: input, shape index: {}]
  %s3 = inlined_call_operand.vmem [shape: bf16[32,4], index: 3, kind: input, shape index: {}]
  %s4 = inlined_call_operand.vmem [shape: f32[32,1], index: 4, kind: input, shape index: {}]
  %s5 = inlined_call_operand.vmem [shape: bf16[64,32], index: 5, kind: input, shape index: {}]
  %s6 = inlined_call_operand.vmem [shape: f32[64,1], index: 6, kind: input, shape index: {}]
  %s7 = inlined_call_operand.vmem [shape: bf16[1,64], index: 7, kind: input, shape index: {}]
  %s8 = inlined_call_operand.<no memory space> [shape: f32[1,1], index: 8, kind: input, shape index: {}]
  %s9 = inlined_call_operand.hbm [shape: f32[1,128], index: 9, kind: output, shape index: {}]
  %s10 = sld [smem:[#allocation0]]
  $region46: #{tpu_custom_call.1} parent=0
    _
  %s12 = ssub.s32 1, %s10
  %s13 = scalar_select 0, %s12, %s10
  %v14 = vstv %s8
  %15 = vst [vmem:[#allocation2] sm:$0x1] %v14
  $region1: #{tpu_custom_call.1} parent=0
    #allocation3 [shape = 'u8[512]{0}', space=vmem, size = 0x400, scoped, tag = 'output window, operand 0, single buffered']
    #allocation4 [shape = 's32[1]{0}', space=sflag, size = 0x4, scoped, tag = 'scoped memory for tpu_custom_call.1']
    %16 = vsyncpa [#allocation4], 0
    // Predicated region
    $region2: #{tpu_custom_call.1} parent=1 // pred_check
      _
    $region3: #{tpu_custom_call.1} parent=1 // pred_check_branch
      %18 = sbr.rel (0) target = $region5
    $region4: #{tpu_custom_call.1} parent=1 // pred_region
      _
    $region5: #{tpu_custom_call.1} parent=1 // pred_fallthru
      _
    // Predicated region
    $region6: #{tpu_custom_call.1} parent=1 // pred_check
      _
    $region7: #{tpu_custom_call.1} parent=1 // pred_check_branch
      %20 = sbr.rel (0) target = $region9
    $region8: #{tpu_custom_call.1} parent=1 // pred_region
      _
    $region9: #{tpu_custom_call.1} parent=1 // pred_fallthru
      _
    // Predicated region
    $region10: #{tpu_custom_call.1} parent=1 // pred_check
      _
    $region11: #{tpu_custom_call.1} parent=1 // pred_check_branch
      %22 = sbr.rel (0) target = $region13
    $region12: #{tpu_custom_call.1} parent=1 // pred_region
      _
    $region13: #{tpu_custom_call.1} parent=1 // pred_fallthru
      _
    // Predicated region
    $region14: #{tpu_custom_call.1} parent=1 // pred_check
      _
    $region15: #{tpu_custom_call.1} parent=1 // pred_check_branch
      %24 = sbr.rel (0) target = $region17
    $region16: #{tpu_custom_call.1} parent=1 // pred_region
      _
    $region17: #{tpu_custom_call.1} parent=1 // pred_fallthru
      _
    // Predicated region
    $region18: #{tpu_custom_call.1} parent=1 // pred_check
      _
    $region19: #{tpu_custom_call.1} parent=1 // pred_check_branch
      %26 = sbr.rel (0) target = $region21
    $region20: #{tpu_custom_call.1} parent=1 // pred_region
      _
    $region21: #{tpu_custom_call.1} parent=1 // pred_fallthru
      _
    // Predicated region
    $region22: #{tpu_custom_call.1} parent=1 // pred_check
      _
    $region23: #{tpu_custom_call.1} parent=1 // pred_check_branch
      %28 = sbr.rel (0) target = $region25
    $region24: #{tpu_custom_call.1} parent=1 // pred_region
      _
    $region25: #{tpu_custom_call.1} parent=1 // pred_fallthru
      _
    // Predicated region
    $region26: #{tpu_custom_call.1} parent=1 // pred_check
      _
    $region27: #{tpu_custom_call.1} parent=1 // pred_check_branch
      %30 = sbr.rel (0) target = $region29
    $region28: #{tpu_custom_call.1} parent=1 // pred_region
      _
    $region29: #{tpu_custom_call.1} parent=1 // pred_fallthru
      _
    // Predicated region
    $region30: #{tpu_custom_call.1} parent=1 // pred_check
      _
    $region31: #{tpu_custom_call.1} parent=1 // pred_check_branch
      %32 = sbr.rel (0) target = $region33
    $region32: #{tpu_custom_call.1} parent=1 // pred_region
      _
    $region33: #{tpu_custom_call.1} parent=1 // pred_fallthru
      _
    // Predicated region
    $region34: #{tpu_custom_call.1} parent=1 // pred_check
      _
    $region35: #{tpu_custom_call.1} parent=1 // pred_check_branch
      %34 = sbr.rel (0) target = $region37
    $region36: #{tpu_custom_call.1} parent=1 // pred_region
      _
    $region37: #{tpu_custom_call.1} parent=1 // pred_fallthru
      _
    %v36 = vld [vmem:[%s0] sm:$0xff]
    %v37 = vld [vmem:[%s0 + $0x8] sm:$0xff]
    %v38 = vld [vmem:[%s0 + $0x10] sm:$0xff]
    %v39 = vld [vmem:[%s0 + $0x18] sm:$0xff]
    %v40 = vld [vmem:[%s0 + $0x20] sm:$0xff]
    %v41 = vld [vmem:[%s0 + $0x28] sm:$0xff]
    %v42 = vld [vmem:[%s0 + $0x30] sm:$0xff]
    %v43 = vld [vmem:[%s0 + $0x38] sm:$0xff]
    %v44 = vld [vmem:[%s0 + $0x40] sm:$0xff]
    %v45 = vld [vmem:[%s0 + $0x48] sm:$0xff]
    %v46 = vld [vmem:[%s0 + $0x50] sm:$0xff]
    %v47 = vld [vmem:[%s0 + $0x58] sm:$0xff]
    %v48 = vld [vmem:[%s0 + $0x60] sm:$0xff]
    %v49 = vld [vmem:[%s0 + $0x68] sm:$0xff]
    %v50 = vld [vmem:[%s0 + $0x70] sm:$0xff]
    %v51 = vld [vmem:[%s0 + $0x78] sm:$0xff]
    %v52 = vpack.c.bf16 %v37, %v36
    %v53 = vpack.c.bf16 %v39, %v38
    %v54 = vpack.c.bf16 %v41, %v40
    %v55 = vpack.c.bf16 %v43, %v42
    %v56 = vpack.c.bf16 %v45, %v44
    %v57 = vpack.c.bf16 %v47, %v46
    %v58 = vpack.c.bf16 %v49, %v48
    %v59 = vpack.c.bf16 %v51, %v50
    %v60 = vld [vmem:[%s1] sm:$0xff]
    %v61 = vld [vmem:[%s1 + $0x8] sm:$0xff]
    %v62 = vld [vmem:[%s1 + $0x10] sm:$0xff]
    %v63 = vld [vmem:[%s1 + $0x18] sm:$0xff]
    %v64 = vld [vmem:[%s1 + $0x20] sm:$0xff]
    %v65 = vld [vmem:[%s1 + $0x28] sm:$0xff]
    %v66 = vld [vmem:[%s1 + $0x30] sm:$0xff]
    %v67 = vld [vmem:[%s1 + $0x38] sm:$0xff]
    %v68 = vld [vmem:[%s1 + $0x40] sm:$0xff]
    %v69 = vld [vmem:[%s1 + $0x48] sm:$0xff]
    %v70 = vld [vmem:[%s1 + $0x50] sm:$0xff]
    %v71 = vld [vmem:[%s1 + $0x58] sm:$0xff]
    %v72 = vld [vmem:[%s1 + $0x60] sm:$0xff]
    %v73 = vld [vmem:[%s1 + $0x68] sm:$0xff]
    %v74 = vld [vmem:[%s1 + $0x70] sm:$0xff]
    %v75 = vld [vmem:[%s1 + $0x78] sm:$0xff]
    %v76 = vpack.c.bf16 %v61, %v60
    %v77 = vpack.c.bf16 %v63, %v62
    %v78 = vpack.c.bf16 %v65, %v64
    %v79 = vpack.c.bf16 %v67, %v66
    %v80 = vpack.c.bf16 %v69, %v68
    %v81 = vpack.c.bf16 %v71, %v70
    %v82 = vpack.c.bf16 %v73, %v72
    %v83 = vpack.c.bf16 %v75, %v74
    %v84 = vld [vmem:[%s2] sm:$0xf]
    %v85 = vld [vmem:[%s2 + $0x4] sm:$0xf]
    %v86 = vld [vmem:[%s2 + $0x8] sm:$0xf]
    %v87 = vld [vmem:[%s2 + $0xc] sm:$0xf]
    %v88 = vld [vmem:[%s3] sm:$0xf]
    %v89 = vld [vmem:[%s3 + $0x4] sm:$0xf]
    %v90 = vld [vmem:[%s3 + $0x8] sm:$0xf]
    %v91 = vld [vmem:[%s3 + $0xc] sm:$0xf]
    %v96 = vunpack.c.l.b16 %v88
    %v97 = vunpack.c.l.b16 %v89
    %v98 = vunpack.c.l.b16 %v90
    %v99 = vunpack.c.l.b16 %v91
    %v100 = vpack.c.b16 %v97, %v96
    %v101 = vpack.c.b16 %v99, %v98
    %vm102 = vcmask 31744
    %v104 = vsel %vm102, %v100, 0
    %v107 = vsel %vm102, %v101, 0
    %v110 = vsel %vm102, %v76, 0
    %v113 = vsel %vm102, %v77, 0
    %v116 = vsel %vm102, %v78, 0
    %v119 = vsel %vm102, %v79, 0
    %v122 = vsel %vm102, %v80, 0
    %v125 = vsel %vm102, %v81, 0
    %v128 = vsel %vm102, %v82, 0
    %v131 = vsel %vm102, %v83, 0
    %133 = vmatprep.subr.bf16.mxu0 0
    %134 = vmatpush1.bf16.xpose.msra.mxu0 %v110
    %135 = vmatprep.subr.bf16.mxu0 0
    %136 = vmatpush1.bf16.xpose.msra.mxu0 %v113
    %137 = vmatprep.subr.bf16.mxu0 0
    %138 = vmatpush1.bf16.xpose.msra.mxu0 %v116
    %139 = vmatprep.subr.bf16.mxu0 0
    %140 = vmatpush1.bf16.xpose.msra.mxu0 %v119
    %141 = vmatprep.subr.bf16.mxu0 0
    %142 = vmatpush1.bf16.xpose.msra.mxu0 %v122
    %143 = vmatprep.subr.bf16.mxu0 0
    %144 = vmatpush1.bf16.xpose.msra.mxu0 %v125
    %145 = vmatprep.subr.bf16.mxu0 0
    %146 = vmatpush1.bf16.xpose.msra.mxu0 %v128
    %147 = vmatprep.subr.bf16.mxu0 0
    %148 = vmatpush1.bf16.xpose.msra.mxu0 %v131
    %149 = vmatprep.subr.bf16.mxu0 0
    %150 = vmatpush1.bf16.xpose.msra.mxu0 0
    %151 = vmatprep.subr.bf16.mxu0 0
    %152 = vmatpush1.bf16.xpose.msra.mxu0 0
    %153 = vmatprep.subr.bf16.mxu0 0
    %154 = vmatpush1.bf16.xpose.msra.mxu0 0
    %155 = vmatprep.subr.bf16.mxu0 0
    %156 = vmatpush1.bf16.xpose.msra.mxu0 0
    %157 = vmatprep.subr.bf16.mxu0 0
    %158 = vmatpush1.bf16.xpose.msra.mxu0 0
    %159 = vmatprep.subr.bf16.mxu0 0
    %160 = vmatpush1.bf16.xpose.msra.mxu0 0
    %161 = vmatprep.subr.bf16.mxu0 0
    %162 = vmatpush1.bf16.xpose.msra.mxu0 0
    %163 = vmatprep.subr.bf16.mxu0 0
    %164 = vmatpush1.bf16.xpose.msra.mxu0 0
    %165 = vmatprep.mubr.bf16.mxu0 0
    %166 = vmatmul.mubr.bf16.gmra.mrb[0].mxu0 %v104
    %v167 = vpop.f32.mrb[0].mxu0
    %v168 = vadd.f32 0.0, %v167
    %v169 = vpop.f32.mrb[0].mxu0
    %v170 = vpop.f32.mrb[0].mxu0
    %v171 = vadd.f32 0.0, %v170
    %v172 = vpop.f32.mrb[0].mxu0
    %173 = vmatprep.mubr.bf16.mxu0 0
    %174 = vmatmul.mubr.bf16.gmra.mrb[0].mxu0 %v107
    %v175 = vpop.f32.mrb[0].mxu0
    %v176 = vadd.f32 0.0, %v175
    %v177 = vpop.f32.mrb[0].mxu0
    %v178 = vpop.f32.mrb[0].mxu0
    %v179 = vadd.f32 0.0, %v178
    %v180 = vpop.f32.mrb[0].mxu0
    %181 = vdwg.mxu0
    %v186 = vunpack.c.l.b16 %v84
    %v187 = vunpack.c.l.b16 %v85
    %v188 = vunpack.c.l.b16 %v86
    %v189 = vunpack.c.l.b16 %v87
    %v190 = vpack.c.b16 %v187, %v186
    %v191 = vpack.c.b16 %v189, %v188
    %vm192 = vcmask 64512
    %v194 = vsel %vm192, %v190, 0
    %v197 = vsel %vm192, %v191, 0
    %v200 = vsel %vm192, %v52, 0
    %v203 = vsel %vm192, %v53, 0
    %v206 = vsel %vm192, %v54, 0
    %v209 = vsel %vm192, %v55, 0
    %v212 = vsel %vm192, %v56, 0
    %v215 = vsel %vm192, %v57, 0
    %v218 = vsel %vm192, %v58, 0
    %v221 = vsel %vm192, %v59, 0
    %223 = vmatprep.subr.bf16.mxu0 0
    %224 = vmatpush1.bf16.xpose.msra.mxu0 %v200
    %225 = vmatprep.subr.bf16.mxu0 0
    %226 = vmatpush1.bf16.xpose.msra.mxu0 %v203
    %227 = vmatprep.subr.bf16.mxu0 0
    %228 = vmatpush1.bf16.xpose.msra.mxu0 %v206
    %229 = vmatprep.subr.bf16.mxu0 0
    %230 = vmatpush1.bf16.xpose.msra.mxu0 %v209
    %231 = vmatprep.subr.bf16.mxu0 0
    %232 = vmatpush1.bf16.xpose.msra.mxu0 %v212
    %233 = vmatprep.subr.bf16.mxu0 0
    %234 = vmatpush1.bf16.xpose.msra.mxu0 %v215
    %235 = vmatprep.subr.bf16.mxu0 0
    %236 = vmatpush1.bf16.xpose.msra.mxu0 %v218
    %237 = vmatprep.subr.bf16.mxu0 0
    %238 = vmatpush1.bf16.xpose.msra.mxu0 %v221
    %239 = vmatprep.subr.bf16.mxu0 0
    %240 = vmatpush1.bf16.xpose.msra.mxu0 0
    %241 = vmatprep.subr.bf16.mxu0 0
    %242 = vmatpush1.bf16.xpose.msra.mxu0 0
    %243 = vmatprep.subr.bf16.mxu0 0
    %244 = vmatpush1.bf16.xpose.msra.mxu0 0
    %245 = vmatprep.subr.bf16.mxu0 0
    %246 = vmatpush1.bf16.xpose.msra.mxu0 0
    %247 = vmatprep.subr.bf16.mxu0 0
    %248 = vmatpush1.bf16.xpose.msra.mxu0 0
    %249 = vmatprep.subr.bf16.mxu0 0
    %250 = vmatpush1.bf16.xpose.msra.mxu0 0
    %251 = vmatprep.subr.bf16.mxu0 0
    %252 = vmatpush1.bf16.xpose.msra.mxu0 0
    %253 = vmatprep.subr.bf16.mxu0 0
    %254 = vmatpush1.bf16.xpose.msra.mxu0 0
    %255 = vmatprep.mubr.bf16.mxu0 0
    %256 = vmatmul.mubr.bf16.gmra.mrb[0].mxu0 %v194
    %v257 = vpop.f32.mrb[0].mxu0
    %v258 = vadd.f32 %v168, %v257
    %v259 = vpop.f32.mrb[0].mxu0
    %v260 = vpop.f32.mrb[0].mxu0
    %v261 = vadd.f32 %v171, %v260
    %v262 = vpop.f32.mrb[0].mxu0
    %263 = vmatprep.mubr.bf16.mxu0 0
    %264 = vmatmul.mubr.bf16.gmra.mrb[0].mxu0 %v197
    %v265 = vpop.f32.mrb[0].mxu0
    %v266 = vadd.f32 %v176, %v265
    %v267 = vpop.f32.mrb[0].mxu0
    %v268 = vpop.f32.mrb[0].mxu0
    %v269 = vadd.f32 %v179, %v268
    %v270 = vpop.f32.mrb[0].mxu0
    %271 = vdwg.mxu0
    %v272 = vld [vmem:[%s4] sm:$0xff]
    %v273 = vld [vmem:[%s4 + $0x8] sm:$0xff]
    %v274 = vld [vmem:[%s4 + $0x10] sm:$0xff]
    %v275 = vld [vmem:[%s4 + $0x18] sm:$0xff]
    %277 = vset.pattern.permute.xlu0 0
    %278 = vperm.xlu0 %277, %v272
    %v279 = vpop.permute.xlu0 %278
    %282 = vset.pattern.permute.xlu0 0
    %283 = vperm.xlu0 %282, %v273
    %v284 = vpop.permute.xlu0 %283
    %287 = vset.pattern.permute.xlu0 0
    %288 = vperm.xlu0 %287, %v274
    %v289 = vpop.permute.xlu0 %288
    %292 = vset.pattern.permute.xlu0 0
    %293 = vperm.xlu0 %292, %v275
    %v294 = vpop.permute.xlu0 %293
    %v296 = vadd.f32 %v258, %v279
    %v297 = vadd.f32 %v261, %v284
    %v298 = vadd.f32 %v266, %v289
    %v299 = vadd.f32 %v269, %v294
    %v300 = vmax.f32 %v296, 0.0
    %v301 = vmax.f32 %v297, 0.0
    %v302 = vmax.f32 %v298, 0.0
    %v303 = vmax.f32 %v299, 0.0
    %v304 = vpack.c.bf16 %v301, %v300
    %v305 = vpack.c.bf16 %v303, %v302
    %v306 = vld [vmem:[%s5] sm:$0xf]
    %v307 = vld [vmem:[%s5 + $0x4] sm:$0xf]
    %v308 = vld [vmem:[%s5 + $0x8] sm:$0xf]
    %v309 = vld [vmem:[%s5 + $0xc] sm:$0xf]
    %v310 = vld [vmem:[%s5 + $0x10] sm:$0xf]
    %v311 = vld [vmem:[%s5 + $0x14] sm:$0xf]
    %v312 = vld [vmem:[%s5 + $0x18] sm:$0xf]
    %v313 = vld [vmem:[%s5 + $0x1c] sm:$0xf]
    %v314 = vld [vmem:[%s6] sm:$0xff]
    %v315 = vld [vmem:[%s6 + $0x8] sm:$0xff]
    %v316 = vld [vmem:[%s6 + $0x10] sm:$0xff]
    %v317 = vld [vmem:[%s6 + $0x18] sm:$0xff]
    %v318 = vld [vmem:[%s6 + $0x20] sm:$0xff]
    %v319 = vld [vmem:[%s6 + $0x28] sm:$0xff]
    %v320 = vld [vmem:[%s6 + $0x30] sm:$0xff]
    %v321 = vld [vmem:[%s6 + $0x38] sm:$0xff]
    %323 = vset.pattern.permute.xlu0 0
    %324 = vperm.xlu0 %323, %v314
    %v325 = vpop.permute.xlu0 %324
    %328 = vset.pattern.permute.xlu0 0
    %329 = vperm.xlu0 %328, %v315
    %v330 = vpop.permute.xlu0 %329
    %333 = vset.pattern.permute.xlu0 0
    %334 = vperm.xlu0 %333, %v316
    %v335 = vpop.permute.xlu0 %334
    %338 = vset.pattern.permute.xlu0 0
    %339 = vperm.xlu0 %338, %v317
    %v340 = vpop.permute.xlu0 %339
    %343 = vset.pattern.permute.xlu0 0
    %344 = vperm.xlu0 %343, %v318
    %v345 = vpop.permute.xlu0 %344
    %348 = vset.pattern.permute.xlu0 0
    %349 = vperm.xlu0 %348, %v319
    %v350 = vpop.permute.xlu0 %349
    %353 = vset.pattern.permute.xlu0 0
    %354 = vperm.xlu0 %353, %v320
    %v355 = vpop.permute.xlu0 %354
    %358 = vset.pattern.permute.xlu0 0
    %359 = vperm.xlu0 %358, %v321
    %v360 = vpop.permute.xlu0 %359
    %v370 = vunpack.c.l.b16 %v306
    %v371 = vunpack.c.l.b16 %v307
    %v372 = vunpack.c.l.b16 %v308
    %v373 = vunpack.c.l.b16 %v309
    %v374 = vunpack.c.l.b16 %v310
    %v375 = vunpack.c.l.b16 %v311
    %v376 = vunpack.c.l.b16 %v312
    %v377 = vunpack.c.l.b16 %v313
    %v378 = vpack.c.b16 %v371, %v370
    %v379 = vpack.c.b16 %v373, %v372
    %v380 = vpack.c.b16 %v375, %v374
    %v381 = vpack.c.b16 %v377, %v376
    %vm382 = vcmask 261120
    %v384 = vsel %vm382, %v378, 0
    %v387 = vsel %vm382, %v379, 0
    %v390 = vsel %vm382, %v380, 0
    %v393 = vsel %vm382, %v381, 0
    %395 = vmatprep.subr.bf16.mxu0 0
    %396 = vmatpush1.bf16.msra.mxu0 %v304
    %397 = vmatprep.subr.bf16.mxu0 0
    %398 = vmatpush1.bf16.msra.mxu0 %v305
    %399 = vmatprep.subr.bf16.mxu0 0
    %400 = vmatpush1.bf16.msra.mxu0 0
    %401 = vmatprep.subr.bf16.mxu0 0
    %402 = vmatpush1.bf16.msra.mxu0 0
    %403 = vmatprep.subr.bf16.mxu0 0
    %404 = vmatpush1.bf16.msra.mxu0 0
    %405 = vmatprep.subr.bf16.mxu0 0
    %406 = vmatpush1.bf16.msra.mxu0 0
    %407 = vmatprep.subr.bf16.mxu0 0
    %408 = vmatpush1.bf16.msra.mxu0 0
    %409 = vmatprep.subr.bf16.mxu0 0
    %410 = vmatpush1.bf16.msra.mxu0 0
    %411 = vmatprep.subr.bf16.mxu0 0
    %412 = vmatpush1.bf16.msra.mxu0 0
    %413 = vmatprep.subr.bf16.mxu0 0
    %414 = vmatpush1.bf16.msra.mxu0 0
    %415 = vmatprep.subr.bf16.mxu0 0
    %416 = vmatpush1.bf16.msra.mxu0 0
    %417 = vmatprep.subr.bf16.mxu0 0
    %418 = vmatpush1.bf16.msra.mxu0 0
    %419 = vmatprep.subr.bf16.mxu0 0
    %420 = vmatpush1.bf16.msra.mxu0 0
    %421 = vmatprep.subr.bf16.mxu0 0
    %422 = vmatpush1.bf16.msra.mxu0 0
    %423 = vmatprep.subr.bf16.mxu0 0
    %424 = vmatpush1.bf16.msra.mxu0 0
    %425 = vmatprep.subr.bf16.mxu0 0
    %426 = vmatpush1.bf16.msra.mxu0 0
    %427 = vmatprep.mubr.bf16.mxu0 0
    %428 = vmatmul.mubr.bf16.gmra.mrb[0].mxu0 %v384
    %v429 = vpop.f32.mrb[0].mxu0
    %v430 = vadd.f32 %v325, %v429
    %v431 = vpop.f32.mrb[0].mxu0
    %v432 = vpop.f32.mrb[0].mxu0
    %v433 = vadd.f32 %v330, %v432
    %v434 = vpop.f32.mrb[0].mxu0
    %435 = vmatprep.mubr.bf16.mxu0 0
    %436 = vmatmul.mubr.bf16.gmra.mrb[0].mxu0 %v387
    %v437 = vpop.f32.mrb[0].mxu0
    %v438 = vadd.f32 %v335, %v437
    %v439 = vpop.f32.mrb[0].mxu0
    %v440 = vpop.f32.mrb[0].mxu0
    %v441 = vadd.f32 %v340, %v440
    %v442 = vpop.f32.mrb[0].mxu0
    %443 = vmatprep.mubr.bf16.mxu0 0
    %444 = vmatmul.mubr.bf16.gmra.mrb[0].mxu0 %v390
    %v445 = vpop.f32.mrb[0].mxu0
    %v446 = vadd.f32 %v345, %v445
    %v447 = vpop.f32.mrb[0].mxu0
    %v448 = vpop.f32.mrb[0].mxu0
    %v449 = vadd.f32 %v350, %v448
    %v450 = vpop.f32.mrb[0].mxu0
    %451 = vmatprep.mubr.bf16.mxu0 0
    %452 = vmatmul.mubr.bf16.gmra.mrb[0].mxu0 %v393
    %v453 = vpop.f32.mrb[0].mxu0
    %v454 = vadd.f32 %v355, %v453
    %v455 = vpop.f32.mrb[0].mxu0
    %v456 = vpop.f32.mrb[0].mxu0
    %v457 = vadd.f32 %v360, %v456
    %v458 = vpop.f32.mrb[0].mxu0
    %459 = vdwg.mxu0
    %v460 = vmax.f32 %v430, 0.0
    %v461 = vmax.f32 %v433, 0.0
    %v462 = vmax.f32 %v438, 0.0
    %v463 = vmax.f32 %v441, 0.0
    %v464 = vmax.f32 %v446, 0.0
    %v465 = vmax.f32 %v449, 0.0
    %v466 = vmax.f32 %v454, 0.0
    %v467 = vmax.f32 %v457, 0.0
    %v468 = vpack.c.bf16 %v461, %v460
    %v469 = vpack.c.bf16 %v463, %v462
    %v470 = vpack.c.bf16 %v465, %v464
    %v471 = vpack.c.bf16 %v467, %v466
    %v472 = vld [vmem:[%s7] sm:$0x1]
    %v473 = vld [vmem:[#allocation2] sm:$0x1]
    %475 = vset.pattern.permute.xlu0 0
    %476 = vperm.xlu0 %475, %v473
    %v477 = vpop.permute.xlu0 %476
    %v479 = vlaneseq
    %v480 = vshrl.u32 %v479, 7
    %v481 = vsub.s32 0, %v480
    %v482 = vrot.slane %v477, %v481
    %vm483 = vcmask 523264
    %v485 = vsel %vm483, %v472, 0
    %487 = vmatprep.subr.bf16.mxu0 0
    %488 = vmatpush1.bf16.msra.mxu0 %v468
    %489 = vmatprep.subr.bf16.mxu0 0
    %490 = vmatpush1.bf16.msra.mxu0 %v469
    %491 = vmatprep.subr.bf16.mxu0 0
    %492 = vmatpush1.bf16.msra.mxu0 %v470
    %493 = vmatprep.subr.bf16.mxu0 0
    %494 = vmatpush1.bf16.msra.mxu0 %v471
    %495 = vmatprep.subr.bf16.mxu0 0
    %496 = vmatpush1.bf16.msra.mxu0 0
    %497 = vmatprep.subr.bf16.mxu0 0
    %498 = vmatpush1.bf16.msra.mxu0 0
    %499 = vmatprep.subr.bf16.mxu0 0
    %500 = vmatpush1.bf16.msra.mxu0 0
    %501 = vmatprep.subr.bf16.mxu0 0
    %502 = vmatpush1.bf16.msra.mxu0 0
    %503 = vmatprep.subr.bf16.mxu0 0
    %504 = vmatpush1.bf16.msra.mxu0 0
    %505 = vmatprep.subr.bf16.mxu0 0
    %506 = vmatpush1.bf16.msra.mxu0 0
    %507 = vmatprep.subr.bf16.mxu0 0
    %508 = vmatpush1.bf16.msra.mxu0 0
    %509 = vmatprep.subr.bf16.mxu0 0
    %510 = vmatpush1.bf16.msra.mxu0 0
    %511 = vmatprep.subr.bf16.mxu0 0
    %512 = vmatpush1.bf16.msra.mxu0 0
    %513 = vmatprep.subr.bf16.mxu0 0
    %514 = vmatpush1.bf16.msra.mxu0 0
    %515 = vmatprep.subr.bf16.mxu0 0
    %516 = vmatpush1.bf16.msra.mxu0 0
    %517 = vmatprep.subr.bf16.mxu0 0
    %518 = vmatpush1.bf16.msra.mxu0 0
    %519 = vmatprep.mubr.bf16.mxu0 0
    %520 = vmatmul.mubr.bf16.gmra.mrb[0].mxu0 %v485
    %v521 = vpop.f32.mrb[0].mxu0
    %v522 = vadd.f32 %v482, %v521
    %v523 = vpop.f32.mrb[0].mxu0
    %v524 = vpop.f32.mrb[0].mxu0
    %v525 = vpop.f32.mrb[0].mxu0
    %526 = vdwg.mxu0
    %527 = vst [vmem:[#allocation3] sm:$0x1] %v522
    // Predicated region
    $region38: #{tpu_custom_call.1} parent=1 // pred_check
      _
    $region39: #{tpu_custom_call.1} parent=1 // pred_check_branch
      %529 = sbr.rel (0) target = $region41
    $region40: #{tpu_custom_call.1} parent=1 // pred_region
      %s531 = ssub.s32 16, 16
      %532 = vsyncadd [#allocation4], %s531
      %s534 = sshll.u32 [#allocation3], 4
      %s535 = int_to_ptr.vmem [resolvable:$true] %s534
      %537 = dma.vmem_to_hbm [thread:$0]  %s535, 16, %s9, [#allocation4]
    $region41: #{tpu_custom_call.1} parent=1 // pred_fallthru
      _
    // Predicated region
    $region42: #{tpu_custom_call.1} parent=1 // pred_check
      _
    $region43: #{tpu_custom_call.1} parent=1 // pred_check_branch
      %539 = sbr.rel (0) target = $region45
    $region44: #{tpu_custom_call.1} parent=1 // pred_region
      %540 = dma.done [#allocation4], 16
    $region45: #{tpu_custom_call.1} parent=1 // pred_fallthru
      _
    %541 = vsyncpa [#allocation4], 1

</llo_original>
